<compile_context>
chip_gen: v5e
topology: v5e:2x2
jax: 0.10.0
libtpu: 0.0.40
codegen_flags: <defaults>
</compile_context>

<pallas_src>
import jax
import jax.numpy as jnp
from jax.experimental import pallas as pl
from jax.experimental.pallas import tpu as pltpu

# ----- module hyper-params (from the PyTorch spec) -----
N_EMBD = 64
HIDDEN = 4 * N_EMBD       # 256
DROPOUT = 0.0             # p = 0.0 -> identity


def _round_up(x, m):
    return (x + m - 1) // m * m


# ---------------------------------------------------------------------------
# Pallas kernel: one grid step processes a (tm, C) tile of flattened rows.
# Both matmuls + bias adds + ReLU are fused; weights/biases stay VMEM-resident.
# ---------------------------------------------------------------------------
def ffn_kernel(x_ref, w1_ref, b1_ref, w2_ref, b2_ref, o_ref):
    h = jnp.dot(x_ref[...], w1_ref[...],
                preferred_element_type=jnp.float32)          # (tm, 4C) f32 acc
    h = jnp.maximum(h + b1_ref[...], 0.0)                    # bias + ReLU (VPU, f32)
    y = jnp.dot(h.astype(w2_ref.dtype), w2_ref[...],
                preferred_element_type=jnp.float32)          # (tm, C) f32 acc
    o_ref[...] = (y + b2_ref[...]).astype(o_ref.dtype)


def feed_forward(x, w1, b1, w2, b2, *, tile_m=2048, use_bf16=False):
    """x: (B, T, C); w1: (C, 4C); b1: (1, 4C); w2: (4C, C); b2: (1, C)."""
    B, T, C = x.shape
    H = w1.shape[1]
    M = B * T
    out_dtype = x.dtype

    # Fuse batch & sequence into the matmul M dimension.  No padding copy:
    # the boundary grid block's stores are masked by Pallas.
    x2 = x.reshape(M, C)

    if use_bf16:
        # bf16 MXU operands; accumulation and bias/ReLU math stay f32 in-kernel.
        x2 = x2.astype(jnp.bfloat16)
        w1 = w1.astype(jnp.bfloat16)
        w2 = w2.astype(jnp.bfloat16)

    # Row tile: 8-sublane aligned; at least 2 grid steps when M permits so both
    # v7x TensorCores get work on the "parallel" axis.
    tm = min(tile_m, max(8, _round_up(pl.cdiv(M, 2), 8)))
    grid_m = pl.cdiv(M, tm)

    bytes_el = jnp.dtype(x2.dtype).itemsize
    cost = pl.CostEstimate(
        flops=4 * M * C * H,
        transcendentals=0,
        bytes_accessed=(M * C * bytes_el                       # x in
                        + M * C * jnp.dtype(out_dtype).itemsize  # y out
                        + (C * H + H * C) * bytes_el             # W1, W2
                        + (H + C) * 4),                          # biases (f32)
    )

    out = pl.pallas_call(
        ffn_kernel,
        out_shape=jax.ShapeDtypeStruct((M, C), out_dtype),
        grid=(grid_m,),
        in_specs=[
            pl.BlockSpec((tm, C), lambda i: (i, 0)),   # x rows: streamed per step
            pl.BlockSpec((C, H), lambda i: (0, 0)),    # W1: resident
            pl.BlockSpec((1, H), lambda i: (0, 0)),    # b1: resident
            pl.BlockSpec((H, C), lambda i: (0, 0)),    # W2: resident
            pl.BlockSpec((1, C), lambda i: (0, 0)),    # b2: resident
        ],
        out_specs=pl.BlockSpec((tm, C), lambda i: (i, 0)),
        compiler_params=pltpu.CompilerParams(
            dimension_semantics=("parallel",)),        # megacore-shardable row axis
        cost_estimate=cost,
    )(x2, w1, b1, w2, b2)

    return out.reshape(B, T, C)


# Pure-JAX reference mirroring the PyTorch forward (for correctness check).
def reference_ffn(x, w1, b1, w2, b2):
    h = jnp.maximum(x @ w1 + b1, 0.0)
    return h @ w2 + b2          # Dropout(p=0.0) is identity


if __name__ == "__main__":
    B, T, C = 2, 8, N_EMBD

    key = jax.random.PRNGKey(0)
    kx, k1, kb1, k2, kb2 = jax.random.split(key, 5)

    x = jax.random.normal(kx, (B, T, C), jnp.float32)
    # Linear weights stored as (in_features, out_features) so x @ W + b matches
    # PyTorch's x @ W.T + b with W stored (out, in).
    w1 = jax.random.normal(k1, (C, HIDDEN), jnp.float32) * 0.05
    b1 = jax.random.normal(kb1, (1, HIDDEN), jnp.float32) * 0.05
    w2 = jax.random.normal(k2, (HIDDEN, C), jnp.float32) * 0.05
    b2 = jax.random.normal(kb2, (1, C), jnp.float32) * 0.05

    out = feed_forward(x, w1, b1, w2, b2)
    out = jax.block_until_ready(out)

    ref = reference_ffn(x, w1, b1, w2, b2)
    assert out.shape == (B, T, C)
    assert jnp.allclose(out, ref, atol=1e-4, rtol=1e-4), "mismatch vs reference"

    print("KERNEL_OK")
</pallas_src>

<mosaic_0001>
module attributes {stable_mosaic.version = 11 : i64} {
  func.func @ffn_kernel(%arg0: i32, %arg1: memref<8x64xf32, #tpu.memory_space<vmem>>, %arg2: memref<64x256xf32, #tpu.memory_space<vmem>>, %arg3: memref<1x256xf32, #tpu.memory_space<vmem>>, %arg4: memref<256x64xf32, #tpu.memory_space<vmem>>, %arg5: memref<1x64xf32, #tpu.memory_space<vmem>>, %arg6: memref<8x64xf32, #tpu.memory_space<vmem>>) attributes {dimension_semantics = [#tpu.dimension_semantics<parallel>], iteration_bounds = array<i64: 2>, scalar_prefetch = 0 : i64, scratch_operands = 0 : i64, tpu.core_type = #tpu.core_type<tc>, window_params = [{transform_indices = @transform_0, window_bounds = array<i64: 8, 64>}, {pipeline_mode = #tpu.pipeline_mode<synchronous>, transform_indices = @transform_1, window_bounds = array<i64: 64, 256>}, {pipeline_mode = #tpu.pipeline_mode<synchronous>, transform_indices = @transform_2, window_bounds = array<i64: 1, 256>}, {pipeline_mode = #tpu.pipeline_mode<synchronous>, transform_indices = @transform_3, window_bounds = array<i64: 256, 64>}, {pipeline_mode = #tpu.pipeline_mode<synchronous>, transform_indices = @transform_4, window_bounds = array<i64: 1, 64>}, {transform_indices = @transform_5, window_bounds = array<i64: 8, 64>}]} {
    %c0 = arith.constant 0 : index
    %c0_0 = arith.constant 0 : index
    %0 = vector.load %arg1[%c0, %c0_0] : memref<8x64xf32, #tpu.memory_space<vmem>>, vector<8x64xf32>
    %c0_1 = arith.constant 0 : index
    %c0_2 = arith.constant 0 : index
    %1 = vector.load %arg2[%c0_1, %c0_2] : memref<64x256xf32, #tpu.memory_space<vmem>>, vector<64x256xf32>
    %cst = arith.constant dense<0.000000e+00> : vector<8x256xf32>
    %2 = tpu.matmul %0, %1, %cst {dimension_numbers = #tpu.dot_dimension_numbers<[1], [0], [0], [1], [0, 0, 1, 1], [], []>} : vector<8x64xf32>, vector<64x256xf32>, vector<8x256xf32> -> vector<8x256xf32>
    %c0_3 = arith.constant 0 : index
    %c0_4 = arith.constant 0 : index
    %3 = vector.load %arg3[%c0_3, %c0_4] : memref<1x256xf32, #tpu.memory_space<vmem>>, vector<1x256xf32>
    %4 = vector.broadcast %3 : vector<1x256xf32> to vector<8x256xf32>
    %5 = arith.addf %2, %4 : vector<8x256xf32>
    %cst_5 = arith.constant 0.000000e+00 : f32
    %6 = vector.broadcast %cst_5 : f32 to vector<8x256xf32>
    %7 = arith.maximumf %5, %6 : vector<8x256xf32>
    %c0_6 = arith.constant 0 : index
    %c0_7 = arith.constant 0 : index
    %8 = vector.load %arg4[%c0_6, %c0_7] : memref<256x64xf32, #tpu.memory_space<vmem>>, vector<256x64xf32>
    %cst_8 = arith.constant dense<0.000000e+00> : vector<8x64xf32>
    %9 = tpu.matmul %7, %8, %cst_8 {dimension_numbers = #tpu.dot_dimension_numbers<[1], [0], [0], [1], [0, 0, 1, 1], [], []>} : vector<8x256xf32>, vector<256x64xf32>, vector<8x64xf32> -> vector<8x64xf32>
    %c0_9 = arith.constant 0 : index
    %c0_10 = arith.constant 0 : index
    %10 = vector.load %arg5[%c0_9, %c0_10] : memref<1x64xf32, #tpu.memory_space<vmem>>, vector<1x64xf32>
    %11 = vector.broadcast %10 : vector<1x64xf32> to vector<8x64xf32>
    %12 = arith.addf %9, %11 : vector<8x64xf32>
    %c0_11 = arith.constant 0 : index
    %c0_12 = arith.constant 0 : index
    %13 = vector.load %arg6[%c0_11, %c0_12] : memref<8x64xf32, #tpu.memory_space<vmem>>, vector<8x64xf32>
    tpu.vector_store %arg6[%c0_11, %c0_12], %12 {strides = array<i32>} : memref<8x64xf32, #tpu.memory_space<vmem>>, vector<8x64xf32>,
    return
  }
  func.func @transform_0(%arg0: i32) -> (i32, i32) {
    %c0_i32 = arith.constant 0 : i32
    %c0_i32_0 = arith.constant 0 : i32
    return %arg0, %c0_i32 : i32, i32
  }
  func.func @transform_1(%arg0: i32) -> (i32, i32) {
    %c0_i32 = arith.constant 0 : i32
    %c0_i32_0 = arith.constant 0 : i32
    %c0_i32_1 = arith.constant 0 : i32
    return %c0_i32, %c0_i32_0 : i32, i32
  }
  func.func @transform_2(%arg0: i32) -> (i32, i32) {
    %c0_i32 = arith.constant 0 : i32
    %c0_i32_0 = arith.constant 0 : i32
    %c0_i32_1 = arith.constant 0 : i32
    return %c0_i32, %c0_i32_0 : i32, i32
  }
  func.func @transform_3(%arg0: i32) -> (i32, i32) {
    %c0_i32 = arith.constant 0 : i32
    %c0_i32_0 = arith.constant 0 : i32
    %c0_i32_1 = arith.constant 0 : i32
    return %c0_i32, %c0_i32_0 : i32, i32
  }
  func.func @transform_4(%arg0: i32) -> (i32, i32) {
    %c0_i32 = arith.constant 0 : i32
    %c0_i32_0 = arith.constant 0 : i32
    %c0_i32_1 = arith.constant 0 : i32
    return %c0_i32, %c0_i32_0 : i32, i32
  }
  func.func @transform_5(%arg0: i32) -> (i32, i32) {
    %c0_i32 = arith.constant 0 : i32
    %c0_i32_0 = arith.constant 0 : i32
    return %arg0, %c0_i32 : i32, i32
  }
}

</mosaic_0001>

<llo_original>
// kernel: tpu_custom_call.1
$region0: #{tpu_custom_call.1}
  #allocation0 [shape = 'u32[]', space=smem, size = 0x4, offset = 0x4, fixed_abs, tag = 'smem constant byte address 0x4 - core index']
  #allocation1 [shape = 'u32[72,128]{1,0:T(1,128)}', space=vmem, size = 0x9000, scoped, tag = 'internal scratch']
  %s0 = inlined_call_operand.vmem [shape: f32[16,64], index: 0, kind: input, shape index: {}]
  %s1 = inlined_call_operand.vmem [shape: f32[64,256], index: 1, kind: input, shape index: {}]
  %s2 = inlined_call_operand.vmem [shape: f32[1,256], index: 2, kind: input, shape index: {}]
  %s3 = inlined_call_operand.vmem [shape: f32[256,64], index: 3, kind: input, shape index: {}]
  %s4 = inlined_call_operand.vmem [shape: f32[1,64], index: 4, kind: input, shape index: {}]
  %s5 = inlined_call_operand.hbm [shape: f32[16,64], index: 5, kind: output, shape index: {}]
  %s6 = sld [smem:[#allocation0]]
  $region53: #{tpu_custom_call.1} parent=0
    _
  %s8 = ssub.s32 1, %s6
  %s9 = scalar_select 0, %s8, %s6
  $region1: #{tpu_custom_call.1} parent=0
    #allocation2 [shape = 'u8[8192]{0}', space=vmem, size = 0x2000, scoped, tag = 'output window, operand 0']
    #allocation3 [shape = 's32[2]{0}', space=sflag, size = 0x8, scoped, tag = 'scoped memory for tpu_custom_call.1']
    %10 = vsyncpa [#allocation3], 0
    %s11 = scalar_lea.sflag [#allocation3], 1
    %12 = vsyncpa %s11, 0
    loop: start=0, step=1, limit=4
    $region2: #{tpu_custom_call.1} parent=1 // loop_pre_header
      _
    $region3: #{tpu_custom_call.1} parent=1 // loop_header
      %s14 = sphi 0, %s18
      %p15 = scmp.ge.s32.totalorder %s14, 4
      %s24 = sphi 0, %s26
      %s27 = sphi 0, %s24
      %s28 = sphi 0, %s27
      %s44 = sphi 0, %s28
      %s48 = sphi 0, %s48
      %s50 = sphi 0, %s48
      %s51 = sphi 0, %s50
      %s65 = sphi 0, %s51
      %s69 = sphi 0, %s69
      %s71 = sphi 0, %s69
      %s72 = sphi 0, %s71
      %s86 = sphi 0, %s72
      %s90 = sphi 0, %s90
      %s92 = sphi 0, %s90
      %s93 = sphi 0, %s92
      %s107 = sphi 0, %s93
      %s111 = sphi 0, %s111
      %s113 = sphi 0, %s111
      %s114 = sphi 0, %s113
      %s128 = sphi 0, %s114
      %s134 = sphi 0, %s136
      %s137 = sphi 0, %s134
      %s138 = sphi 0, %s137
      %s154 = sphi 0, %s138
    $region4: #{tpu_custom_call.1} parent=1 // loop_header_branch
      %17 = sbr.rel (%p15) target = $region8
    $region5: #{tpu_custom_call.1} parent=1 // loop_body
      %s19 = ssub.s32 %s14, 1
      %s20 = ssub.s32 %s14, 2
      %s21 = sadd.s32 %s14, 1
      %s22 = ssub.s32 %s14, %s21
      %p23 = scmp.eq.s32.totalorder %s22, 0
      %s25 = sadd.s32 %s24, 1
      %s26 = scalar_select %p23, %s24, %s25
      %p29 = pneg %p23
      %p30 = scmp.eq.s32.totalorder %s14, 1
      %p31 = por %p29, %p30
      %p32 = scmp.ne.s32.totalorder %s24, %s27
      %p33 = scmp.eq.s32.totalorder %s14, 0
      %p34 = por %p32, %p33
      %p35 = scmp.ne.s32.totalorder %s24, %s27
      %p36 = scmp.eq.s32.totalorder %s19, 1
      %p37 = por %p35, %p36
      %p38 = scmp.ne.s32.totalorder %s27, %s28
      %p39 = scmp.eq.s32.totalorder %s19, 0
      %p40 = por %p38, %p39
      %p41 = scmp.ne.s32.totalorder %s27, %s28
      %p42 = scmp.eq.s32.totalorder %s20, 1
      %p43 = por %p41, %p42
      %p45 = scmp.ne.s32.totalorder %s28, %s44
      %p46 = scmp.eq.s32.totalorder %s20, 0
      %p47 = por %p45, %p46
      %s49 = sadd.s32 %s48, 1
      %p52 = scmp.eq.s32.totalorder %s14, 1
      %p53 = scmp.ne.s32.totalorder %s48, %s50
      %p54 = scmp.eq.s32.totalorder %s14, 0
      %p55 = por %p53, %p54
      %p56 = scmp.ne.s32.totalorder %s48, %s50
      %p57 = scmp.eq.s32.totalorder %s19, 1
      %p58 = por %p56, %p57
      %p59 = scmp.ne.s32.totalorder %s50, %s51
      %p60 = scmp.eq.s32.totalorder %s19, 0
      %p61 = por %p59, %p60
      %p62 = scmp.ne.s32.totalorder %s50, %s51
      %p63 = scmp.eq.s32.totalorder %s20, 1
      %p64 = por %p62, %p63
      %p66 = scmp.ne.s32.totalorder %s51, %s65
      %p67 = scmp.eq.s32.totalorder %s20, 0
      %p68 = por %p66, %p67
      %s70 = sadd.s32 %s69, 1
      %p73 = scmp.eq.s32.totalorder %s14, 1
      %p74 = scmp.ne.s32.totalorder %s69, %s71
      %p75 = scmp.eq.s32.totalorder %s14, 0
      %p76 = por %p74, %p75
      %p77 = scmp.ne.s32.totalorder %s69, %s71
      %p78 = scmp.eq.s32.totalorder %s19, 1
      %p79 = por %p77, %p78
      %p80 = scmp.ne.s32.totalorder %s71, %s72
      %p81 = scmp.eq.s32.totalorder %s19, 0
      %p82 = por %p80, %p81
      %p83 = scmp.ne.s32.totalorder %s71, %s72
      %p84 = scmp.eq.s32.totalorder %s20, 1
      %p85 = por %p83, %p84
      %p87 = scmp.ne.s32.totalorder %s72, %s86
      %p88 = scmp.eq.s32.totalorder %s20, 0
      %p89 = por %p87, %p88
      %s91 = sadd.s32 %s90, 1
      %p94 = scmp.eq.s32.totalorder %s14, 1
      %p95 = scmp.ne.s32.totalorder %s90, %s92
      %p96 = scmp.eq.s32.totalorder %s14, 0
      %p97 = por %p95, %p96
      %p98 = scmp.ne.s32.totalorder %s90, %s92
      %p99 = scmp.eq.s32.totalorder %s19, 1
      %p100 = por %p98, %p99
      %p101 = scmp.ne.s32.totalorder %s92, %s93
      %p102 = scmp.eq.s32.totalorder %s19, 0
      %p103 = por %p101, %p102
      %p104 = scmp.ne.s32.totalorder %s92, %s93
      %p105 = scmp.eq.s32.totalorder %s20, 1
      %p106 = por %p104, %p105
      %p108 = scmp.ne.s32.totalorder %s93, %s107
      %p109 = scmp.eq.s32.totalorder %s20, 0
      %p110 = por %p108, %p109
      %s112 = sadd.s32 %s111, 1
      %p115 = scmp.eq.s32.totalorder %s14, 1
      %p116 = scmp.ne.s32.totalorder %s111, %s113
      %p117 = scmp.eq.s32.totalorder %s14, 0
      %p118 = por %p116, %p117
      %p119 = scmp.ne.s32.totalorder %s111, %s113
      %p120 = scmp.eq.s32.totalorder %s19, 1
      %p121 = por %p119, %p120
      %p122 = scmp.ne.s32.totalorder %s113, %s114
      %p123 = scmp.eq.s32.totalorder %s19, 0
      %p124 = por %p122, %p123
      %p125 = scmp.ne.s32.totalorder %s113, %s114
      %p126 = scmp.eq.s32.totalorder %s20, 1
      %p127 = por %p125, %p126
      %p129 = scmp.ne.s32.totalorder %s114, %s128
      %p130 = scmp.eq.s32.totalorder %s20, 0
      %p131 = por %p129, %p130
      %s132 = ssub.s32 %s14, %s21
      %p133 = scmp.eq.s32.totalorder %s132, 0
      %s135 = sadd.s32 %s134, 1
      %s136 = scalar_select %p133, %s134, %s135
      %p139 = pneg %p133
      %p140 = scmp.eq.s32.totalorder %s14, 1
      %p141 = por %p139, %p140
      %p142 = scmp.ne.s32.totalorder %s134, %s137
      %p143 = scmp.eq.s32.totalorder %s14, 0
      %p144 = por %p142, %p143
      %p145 = scmp.ne.s32.totalorder %s134, %s137
      %p146 = scmp.eq.s32.totalorder %s19, 1
      %p147 = por %p145, %p146
      %p148 = scmp.ne.s32.totalorder %s137, %s138
      %p149 = scmp.eq.s32.totalorder %s19, 0
      %p150 = por %p148, %p149
      %p151 = scmp.ne.s32.totalorder %s137, %s138
      %p152 = scmp.eq.s32.totalorder %s20, 1
      %p153 = por %p151, %p152
      %p155 = scmp.ne.s32.totalorder %s138, %s154
      %p156 = scmp.eq.s32.totalorder %s20, 0
      %p157 = por %p155, %p156
      %p158 = scmp.le.s32.totalorder 1, %s14
      %p159 = scmp.lt.s32.totalorder %s14, 3
      %p160 = pnand %p158, %p159
      %p161 = pneg %p160
      // Predicated region
      $region9: #{tpu_custom_call.1} parent=5 // pred_check
        _
      $region10: #{tpu_custom_call.1} parent=5 // pred_check_branch
        %163 = sbr.rel (%p160) target = $region12
      $region11: #{tpu_custom_call.1} parent=5 // pred_region
        %s164 = ssub.s32 %s14, 1
        // Predicated region
        $region13: #{tpu_custom_call.1} parent=11 // pred_check
          %p165 = pneg %p61
        $region14: #{tpu_custom_call.1} parent=11 // pred_check_branch
          %167 = sbr.rel (%p165) target = $region16
        $region15: #{tpu_custom_call.1} parent=11 // pred_region
          _
        $region16: #{tpu_custom_call.1} parent=11 // pred_fallthru
          _
        // Predicated region
        $region17: #{tpu_custom_call.1} parent=11 // pred_check
          %p168 = pneg %p82
        $region18: #{tpu_custom_call.1} parent=11 // pred_check_branch
          %170 = sbr.rel (%p168) target = $region20
        $region19: #{tpu_custom_call.1} parent=11 // pred_region
          _
        $region20: #{tpu_custom_call.1} parent=11 // pred_fallthru
          _
        // Predicated region
        $region21: #{tpu_custom_call.1} parent=11 // pred_check
          %p171 = pneg %p103
        $region22: #{tpu_custom_call.1} parent=11 // pred_check_branch
          %173 = sbr.rel (%p171) target = $region24
        $region23: #{tpu_custom_call.1} parent=11 // pred_region
          _
        $region24: #{tpu_custom_call.1} parent=11 // pred_fallthru
          _
        // Predicated region
        $region25: #{tpu_custom_call.1} parent=11 // pred_check
          %p174 = pneg %p124
        $region26: #{tpu_custom_call.1} parent=11 // pred_check_branch
          %176 = sbr.rel (%p174) target = $region28
        $region27: #{tpu_custom_call.1} parent=11 // pred_region
          _
        $region28: #{tpu_custom_call.1} parent=11 // pred_fallthru
          _
      $region12: #{tpu_custom_call.1} parent=5 // pred_fallthru
        _
      %p177 = scmp.lt.s32.totalorder %s14, 2
      // Predicated region
      $region29: #{tpu_custom_call.1} parent=5 // pred_check
        %p178 = pneg %p177
      $region30: #{tpu_custom_call.1} parent=5 // pred_check_branch
        %180 = sbr.rel (%p178) target = $region32
      $region31: #{tpu_custom_call.1} parent=5 // pred_region
        // Predicated region
        $region33: #{tpu_custom_call.1} parent=31 // pred_check
          %p181 = pneg %p34
        $region34: #{tpu_custom_call.1} parent=31 // pred_check_branch
          %183 = sbr.rel (%p181) target = $region36
        $region35: #{tpu_custom_call.1} parent=31 // pred_region
          %p184 = scmp.lt.s32.totalorder %s14, 1
          %s185 = scalar_select %p184, %s14, 1
          %s186 = smul.addr %s185, 8
          %s187 = scalar_lea.vmem %s0, %s186
        $region36: #{tpu_custom_call.1} parent=31 // pred_fallthru
          _
      $region32: #{tpu_custom_call.1} parent=5 // pred_fallthru
        _
      %p188 = scmp.le.s32.totalorder 1, %s14
      %p189 = scmp.lt.s32.totalorder %s14, 3
      %p190 = pnand %p188, %p189
      %p191 = pneg %p190
      // Predicated region
      $region37: #{tpu_custom_call.1} parent=5 // pred_check
        _
      $region38: #{tpu_custom_call.1} parent=5 // pred_check_branch
        %193 = sbr.rel (%p190) target = $region40
      $region39: #{tpu_custom_call.1} parent=5 // pred_region
        %s194 = ssub.s32 %s14, 1
        %p195 = scmp.lt.s32.totalorder %s19, 1
        %s196 = scalar_select %p195, %s19, 1
        %s197 = smul.addr %s196, 8
        %s198 = scalar_lea.vmem %s0, %s197
        %p199 = pneg %p40
        %p200 = pneg %p37
        %p201 = pneg %p61
        %p202 = pneg %p58
        %p203 = pneg %p82
        %p204 = pneg %p79
        %p205 = pneg %p103
        %p206 = pneg %p100
        %p207 = pneg %p124
        %p208 = pneg %p121
        %p209 = pneg %p150
        %p210 = pneg %p147
        %s211 = sand.u32 %s137, 1
        %s212 = scalar_lea.sflag [#allocation3], %s211
        %s213 = sand.u32 %s137, 1
        %s214 = smul.addr %s213, 8
        %s215 = scalar_lea.vmem [#allocation2], %s214
        %p216 = scmp.lt.s32.totalorder %s19, 1
        %s217 = scalar_select %p216, %s19, 1
        %s218 = smul.addr %s217, 8
        %s219 = scalar_lea.vmem %s0, %s218
        %v220 = vld [vmem:[%s219] sm:$0xff]
        %v221 = vld [vmem:[%s1] sm:$0xff]
        %v222 = vld [vmem:[%s1 + $0x8] sm:$0xff]
        %v223 = vld [vmem:[%s1 + $0x10] sm:$0xff]
        %v224 = vld [vmem:[%s1 + $0x18] sm:$0xff]
        %v225 = vld [vmem:[%s1 + $0x20] sm:$0xff]
        %v226 = vld [vmem:[%s1 + $0x28] sm:$0xff]
        %v227 = vld [vmem:[%s1 + $0x30] sm:$0xff]
        %v228 = vld [vmem:[%s1 + $0x38] sm:$0xff]
        %v229 = vld [vmem:[%s1 + $0x40] sm:$0xff]
        %v230 = vld [vmem:[%s1 + $0x48] sm:$0xff]
        %v231 = vld [vmem:[%s1 + $0x50] sm:$0xff]
        %v232 = vld [vmem:[%s1 + $0x58] sm:$0xff]
        %v233 = vld [vmem:[%s1 + $0x60] sm:$0xff]
        %v234 = vld [vmem:[%s1 + $0x68] sm:$0xff]
        %v235 = vld [vmem:[%s1 + $0x70] sm:$0xff]
        %v236 = vld [vmem:[%s1 + $0x78] sm:$0xff]
        %v237 = vld [vmem:[%s2] sm:$0x3]
        %v239 = vperm.slane %v237, 0
        %v240 = vperm.slane %v237, 1
        %vm243 = vcmask 523264
        %v245 = vsel %vm243, %v220, 0
        %247 = vmatpush.msra.mxu0 0.0
        %248 = vmatpush.msra.mxu0 0.0
        %249 = vmatpush.msra.mxu0 0.0
        %250 = vmatpush.msra.mxu0 0.0
        %251 = vmatpush.msra.mxu0 0.0
        %252 = vmatpush.msra.mxu0 0.0
        %253 = vmatpush.msra.mxu0 0.0
        %254 = vmatpush.msra.mxu0 0.0
        %255 = vmatpush.msra.mxu0 %v235
        %256 = vmatpush.msra.mxu0 %v233
        %257 = vmatpush.msra.mxu0 %v231
        %258 = vmatpush.msra.mxu0 %v229
        %259 = vmatpush.msra.mxu0 %v227
        %260 = vmatpush.msra.mxu0 %v225
        %261 = vmatpush.msra.mxu0 %v223
        %262 = vmatpush.msra.mxu0 %v221
        %263 = vmatmul.f32.gmra.mxu0 %v245
        %v264 = vpop.f32.mrf.mxu0
        %v265 = vadd.f32 %v239, %v264
        %266 = vdwg.mxu0
        %267 = vmatpush.msra.mxu0 0.0
        %268 = vmatpush.msra.mxu0 0.0
        %269 = vmatpush.msra.mxu0 0.0
        %270 = vmatpush.msra.mxu0 0.0
        %271 = vmatpush.msra.mxu0 0.0
        %272 = vmatpush.msra.mxu0 0.0
        %273 = vmatpush.msra.mxu0 0.0
        %274 = vmatpush.msra.mxu0 0.0
        %275 = vmatpush.msra.mxu0 %v236
        %276 = vmatpush.msra.mxu0 %v234
        %277 = vmatpush.msra.mxu0 %v232
        %278 = vmatpush.msra.mxu0 %v230
        %279 = vmatpush.msra.mxu0 %v228
        %280 = vmatpush.msra.mxu0 %v226
        %281 = vmatpush.msra.mxu0 %v224
        %282 = vmatpush.msra.mxu0 %v222
        %283 = vmatmul.f32.gmra.mxu0 %v245
        %v284 = vpop.f32.mrf.mxu0
        %v285 = vadd.f32 %v240, %v284
        %286 = vdwg.mxu0
        %v287 = vmax.f32 %v265, 0.0
        %v288 = vmax.f32 %v285, 0.0
        %v289 = vld [vmem:[%s3] sm:$0xff]
        %v290 = vld [vmem:[%s3 + $0x8] sm:$0xff]
        %v291 = vld [vmem:[%s3 + $0x10] sm:$0xff]
        %v292 = vld [vmem:[%s3 + $0x18] sm:$0xff]
        %v293 = vld [vmem:[%s3 + $0x20] sm:$0xff]
        %v294 = vld [vmem:[%s3 + $0x28] sm:$0xff]
        %v295 = vld [vmem:[%s3 + $0x30] sm:$0xff]
        %v296 = vld [vmem:[%s3 + $0x38] sm:$0xff]
        %v297 = vld [vmem:[%s3 + $0x40] sm:$0xff]
        %v298 = vld [vmem:[%s3 + $0x48] sm:$0xff]
        %v299 = vld [vmem:[%s3 + $0x50] sm:$0xff]
        %v300 = vld [vmem:[%s3 + $0x58] sm:$0xff]
        %v301 = vld [vmem:[%s3 + $0x60] sm:$0xff]
        %v302 = vld [vmem:[%s3 + $0x68] sm:$0xff]
        %v303 = vld [vmem:[%s3 + $0x70] sm:$0xff]
        %v304 = vld [vmem:[%s3 + $0x78] sm:$0xff]
        %v305 = vld [vmem:[%s3 + $0x80] sm:$0xff]
        %v306 = vld [vmem:[%s3 + $0x88] sm:$0xff]
        %v307 = vld [vmem:[%s3 + $0x90] sm:$0xff]
        %v308 = vld [vmem:[%s3 + $0x98] sm:$0xff]
        %v309 = vld [vmem:[%s3 + $0xa0] sm:$0xff]
        %v310 = vld [vmem:[%s3 + $0xa8] sm:$0xff]
        %v311 = vld [vmem:[%s3 + $0xb0] sm:$0xff]
        %v312 = vld [vmem:[%s3 + $0xb8] sm:$0xff]
        %v313 = vld [vmem:[%s3 + $0xc0] sm:$0xff]
        %v314 = vld [vmem:[%s3 + $0xc8] sm:$0xff]
        %v315 = vld [vmem:[%s3 + $0xd0] sm:$0xff]
        %v316 = vld [vmem:[%s3 + $0xd8] sm:$0xff]
        %v317 = vld [vmem:[%s3 + $0xe0] sm:$0xff]
        %v318 = vld [vmem:[%s3 + $0xe8] sm:$0xff]
        %v319 = vld [vmem:[%s3 + $0xf0] sm:$0xff]
        %v320 = vld [vmem:[%s3 + $0xf8] sm:$0xff]
        %v321 = vld [vmem:[%s4] sm:$0x1]
        %v323 = vperm.slane %v321, 0
        %325 = vmatpush.msra.mxu0 %v304
        %326 = vmatpush.msra.mxu0 %v303
        %327 = vmatpush.msra.mxu0 %v302
        %328 = vmatpush.msra.mxu0 %v301
        %329 = vmatpush.msra.mxu0 %v300
        %330 = vmatpush.msra.mxu0 %v299
        %331 = vmatpush.msra.mxu0 %v298
        %332 = vmatpush.msra.mxu0 %v297
        %333 = vmatpush.msra.mxu0 %v296
        %334 = vmatpush.msra.mxu0 %v295
        %335 = vmatpush.msra.mxu0 %v294
        %336 = vmatpush.msra.mxu0 %v293
        %337 = vmatpush.msra.mxu0 %v292
        %338 = vmatpush.msra.mxu0 %v291
        %339 = vmatpush.msra.mxu0 %v290
        %340 = vmatpush.msra.mxu0 %v289
        %341 = vmatmul.f32.gmra.mxu0 %v287
        %v342 = vpop.f32.mrf.mxu0
        %v343 = vadd.f32 %v323, %v342
        %344 = vdwg.mxu0
        %345 = vmatpush.msra.mxu0 %v320
        %346 = vmatpush.msra.mxu0 %v319
        %347 = vmatpush.msra.mxu0 %v318
        %348 = vmatpush.msra.mxu0 %v317
        %349 = vmatpush.msra.mxu0 %v316
        %350 = vmatpush.msra.mxu0 %v315
        %351 = vmatpush.msra.mxu0 %v314
        %352 = vmatpush.msra.mxu0 %v313
        %353 = vmatpush.msra.mxu0 %v312
        %354 = vmatpush.msra.mxu0 %v311
        %355 = vmatpush.msra.mxu0 %v310
        %356 = vmatpush.msra.mxu0 %v309
        %357 = vmatpush.msra.mxu0 %v308
        %358 = vmatpush.msra.mxu0 %v307
        %359 = vmatpush.msra.mxu0 %v306
        %360 = vmatpush.msra.mxu0 %v305
        %361 = vmatmul.f32.gmra.mxu0 %v288
        %v362 = vpop.f32.mrf.mxu0
        %v363 = vadd.f32 %v343, %v362
        %364 = vdwg.mxu0
        %365 = vst.msk [vmem:[%s215] sm:$0xff] %vm243, %v363
        %s366 = sand.u32 %s137, 1
        %s367 = scalar_lea.sflag [#allocation3], %s366
        %s368 = sand.u32 %s137, 1
        %s369 = smul.addr %s368, 8
        %s370 = scalar_lea.vmem [#allocation2], %s369
        // Predicated region
        $region41: #{tpu_custom_call.1} parent=39 // pred_check
          %p371 = pneg %p147
        $region42: #{tpu_custom_call.1} parent=39 // pred_check_branch
          %373 = sbr.rel (%p371) target = $region44
        $region43: #{tpu_custom_call.1} parent=39 // pred_region
          %375 = vsyncadd %s367, 0
          %s376 = smul.addr %s19, 8
          %s377 = scalar_lea.hbm %s5, %s376
          %s379 = sshll.u32 %s370, 4
          %s380 = int_to_ptr.vmem [resolvable:$true] %s379
          %s381 = sshll.u32 %s377, 4
          %s382 = int_to_ptr.hbm [resolvable:$true] %s381
          %384 = dma.vmem_to_hbm [thread:$0]  %s380, 128, %s382, %s367
        $region44: #{tpu_custom_call.1} parent=39 // pred_fallthru
          _
      $region40: #{tpu_custom_call.1} parent=5 // pred_fallthru
        _
      %p385 = scmp.le.s32.totalorder 2, %s14
      // Predicated region
      $region45: #{tpu_custom_call.1} parent=5 // pred_check
        %p386 = pneg %p385
      $region46: #{tpu_custom_call.1} parent=5 // pred_check_branch
        %388 = sbr.rel (%p386) target = $region48
      $region47: #{tpu_custom_call.1} parent=5 // pred_region
        %s389 = ssub.s32 %s14, 2
        // Predicated region
        $region49: #{tpu_custom_call.1} parent=47 // pred_check
          %p390 = pneg %p153
        $region50: #{tpu_custom_call.1} parent=47 // pred_check_branch
          %392 = sbr.rel (%p390) target = $region52
        $region51: #{tpu_custom_call.1} parent=47 // pred_region
          %s393 = sand.u32 %s138, 1
          %s394 = scalar_lea.sflag [#allocation3], %s393
          %s395 = sand.u32 %s138, 1
          %s396 = smul.addr %s395, 8
          %s397 = scalar_lea.vmem [#allocation2], %s396
          %399 = dma.done %s394, 128
        $region52: #{tpu_custom_call.1} parent=47 // pred_fallthru
          _
      $region48: #{tpu_custom_call.1} parent=5 // pred_fallthru
        _
    $region6: #{tpu_custom_call.1} parent=1 // loop_footer
      %s18 = sadd.s32 1, %s14
    $region7: #{tpu_custom_call.1} parent=1 // loop_footer_branch
      %13 = sbr.rel target = $region3
    $region8: #{tpu_custom_call.1} parent=1 // loop_exit
      _
    %400 = vsyncpa [#allocation3], 1
    %s401 = scalar_lea.sflag [#allocation3], 1
    %402 = vsyncpa %s401, 1

</llo_original>
